<compile_context>
chip_gen: v6e
topology: v6e:2x2x1
jax: 0.10.0
libtpu: 0.0.40
codegen_flags: <defaults>
</compile_context>

<pallas_src>
import numpy as np
import jax
import jax.numpy as jnp
from jax.experimental import pallas as pl
from jax.experimental.pallas import tpu as pltpu

# ------------------- NdpCnn hyper-parameters (small instance) -----------------
DOF = 16                            # len(state_index) == input_size
LAYER_SIZES = [DOF, 64, 32]         # middle-layer sizes (must start with DOF)
N_BASIS = 5                         # N radial basis functions
A_X = 1.0                           # canonical-system gain
A_Z = 25.0                          # transformation-system gain
B_Z = A_Z / 4.0
TAU = 1.0
DT = 0.01
STEPS = int(round(TAU / DT)) + 1    # 101 trajectory points
STEPS_PAD = 104                     # padded to a multiple of 8 sublanes
OUT_SIZE = N_BASIS * DOF + 2 * DOF  # last_fc output dim (goal, weights, unused)
B_INIT = 0.1                        # hidden-layer bias init value

# TPU-friendly padded layout
B_PAD = 8                           # trajectories per grid step (one sublane group)
R_PAD = B_PAD * DOF                 # 128 -> one full vreg lane row, r = b*DOF + d
N_CHUNK = N_BASIS + 1               # [goal | w_0 .. w_{N-1}]
E_COLS = N_CHUNK * R_PAD            # 768 expanded last-layer columns
Z0 = 0.01 * TAU                     # dy0 = 0.01  ->  z0 = dy0 * tau (constant)


# ----------------------- single fused Pallas kernel ---------------------------
def _ndp_kernel(x_ref, y0_ref, w1_ref, b1_ref, w2_ref, b2_ref,
                w3e_ref, b3e_ref, bmask_ref, m_ref, o_ref):
    # --- fused MLP (bf16 MXU operands, f32 accumulation, ReLU) ----------------
    h = jnp.dot(x_ref[0], w1_ref[...],
                preferred_element_type=jnp.float32) + b1_ref[...]
    h = jnp.maximum(h, 0.0).astype(jnp.bfloat16)
    h = jnp.dot(h, w2_ref[...],
                preferred_element_type=jnp.float32) + b2_ref[...]
    h = jnp.maximum(h, 0.0).astype(jnp.bfloat16)                       # (8, 32)

    # --- expanded last_fc: lane r = b*DOF + d holds [goal | w_0..w_4] --------
    # (x1000 and the column gather are folded into w3e/b3e on the host)
    e = jnp.dot(h, w3e_ref[...],
                preferred_element_type=jnp.float32) + b3e_ref[...]     # (8, 768)
    # select sublane b == r // DOF for every lane r (one-hot mask + sum over b)
    red = jnp.sum(e * bmask_ref[...], axis=0, keepdims=True)           # (1, 768)

    g = red[:, 0:R_PAD]                                                # goal per row
    y0 = y0_ref[0]                                                     # (1, 128)
    dgy = g - y0

    # --- DMP Euler integration as one propagator matmul ----------------------
    # Y[t, r] = Hy[t]*y0 + Hz[t]*z0 + a_z*b_z*Psum[t]*g + sum_n Q[t,n]*w_n*(g-y0)
    # V built in vregs (no scratch store/reload in the epilogue).
    rows = [y0, jnp.ones((1, R_PAD), jnp.float32), g]
    for n in range(N_BASIS):
        rows.append(red[:, (n + 1) * R_PAD:(n + 2) * R_PAD] * dgy)
    v = jnp.concatenate(rows, axis=0)                                  # (8, 128)
    o_ref[0] = jnp.dot(m_ref[...], v,
                       preferred_element_type=jnp.float32)             # (104, 128)


# ------------------------ host-side constant precompute -----------------------
def make_phi_np():
    """phi[t] = psi(x_{t+1}) * x_{t+1} / sum(psi); hyper-parameter-only constant."""
    c = np.exp(-A_X * np.linspace(0.0, 1.0, N_BASIS))
    h = np.ones(N_BASIS) * (N_BASIS ** 1.5) / c / A_X
    rows = []
    x = 1.0
    for _ in range(STEPS - 1):
        x = x + (-A_X * x * TAU) * DT          # canonical system (Euler)
        psi = np.exp(-h * (x - c) ** 2)
        rows.append(psi * x / psi.sum())
    return np.stack(rows)                       # (STEPS-1, N_BASIS) float64


def make_propagator_np():
    """Exact impulse response of the Euler-discretized DMP recurrence.

    s = (y, z):  s_{t+1} = A s_t + [0, c*(a_z*b_z*g + f_t)],  c = tau*dt
      y_t = Hy[t]*y0 + Hz[t]*z0 + sum_j P[t,j]*(a_z*b_z*g + f_j),
      P[t, j] = c * [A^{t-1-j}]_{01}.
    Folding f_j = (phi[j] . w) * (g - y0) gives Y = M @ [y0; 1; g; w_n*(g-y0)].
    Padded with zero rows to STEPS_PAD so the output tile is sublane-aligned.
    """
    c = TAU * DT
    A = np.array([[1.0, c], [-c * A_Z * B_Z, 1.0 - c * A_Z]], dtype=np.float64)
    pw = np.zeros((STEPS, 2, 2))
    pw[0] = np.eye(2)
    for t in range(1, STEPS):
        pw[t] = A @ pw[t - 1]
    Hy, Hz = pw[:, 0, 0], pw[:, 0, 1]
    col01 = pw[:, 0, 1]
    P = np.zeros((STEPS, STEPS - 1))
    for t in range(1, STEPS):
        P[t, :t] = c * col01[t - 1::-1]
    Q = P @ make_phi_np()                       # (STEPS, N_BASIS)
    M = np.concatenate([Hy[:, None], (Hz * Z0)[:, None],
                        (A_Z * B_Z * P.sum(axis=1))[:, None], Q], axis=1)
    Mp = np.zeros((STEPS_PAD, M.shape[1]))
    Mp[:STEPS] = M
    return Mp                                   # (STEPS_PAD, 3 + N_BASIS) = (104, 8)


def init_params(key):
    """Deterministic synthetic init mirroring the module's __init__ shapes."""
    k1, k2, k3 = jax.random.split(key, 3)
    bnd = 1.0 / np.sqrt(LAYER_SIZES[1])
    w1 = jax.random.uniform(k1, (LAYER_SIZES[1], LAYER_SIZES[0]), jnp.float32, -bnd, bnd).T
    b1 = jnp.full((1, LAYER_SIZES[1]), B_INIT, jnp.float32)
    bnd = 1.0 / np.sqrt(LAYER_SIZES[2])
    w2 = jax.random.uniform(k2, (LAYER_SIZES[2], LAYER_SIZES[1]), jnp.float32, -bnd, bnd).T
    b2 = jnp.full((1, LAYER_SIZES[2]), B_INIT, jnp.float32)
    w3 = jax.nn.initializers.orthogonal()(k3, (LAYER_SIZES[2], OUT_SIZE), jnp.float32)
    b3 = jnp.zeros((1, OUT_SIZE), jnp.float32)
    return {"w1": w1, "b1": b1, "w2": w2, "b2": b2, "w3": w3, "b3": b3}


def prepare_constants(params):
    """Pack last_fc into the lane-dense (b, d) row layout (x1000 folded in),
    the batch-selection mask, and the DMP propagator matrix.  MXU weight
    operands stored as bf16 (f32 accumulation in-kernel)."""
    w3 = np.asarray(params["w3"], np.float64)
    b3 = np.asarray(params["b3"], np.float64)
    w3e = np.zeros((LAYER_SIZES[2], E_COLS))
    b3e = np.zeros((1, E_COLS))
    for k in range(N_CHUNK):
        for d in range(DOF):
            src = d if k == 0 else DOF + N_BASIS * d + (k - 1)
            for b in range(B_PAD):
                col = k * R_PAD + b * DOF + d
                w3e[:, col] = w3[:, src] * 1000.0
                b3e[0, col] = b3[0, src] * 1000.0
    bmask = np.zeros((B_PAD, E_COLS))
    for b in range(B_PAD):
        for k in range(N_CHUNK):
            s = k * R_PAD + b * DOF
            bmask[b, s:s + DOF] = 1.0
    return {
        "w1": jnp.asarray(params["w1"], jnp.bfloat16),
        "b1": jnp.asarray(params["b1"], jnp.float32),
        "w2": jnp.asarray(params["w2"], jnp.bfloat16),
        "b2": jnp.asarray(params["b2"], jnp.float32),
        "w3e": jnp.asarray(w3e, jnp.bfloat16),
        "b3e": jnp.asarray(b3e, jnp.float32),
        "bmask": jnp.asarray(bmask, jnp.float32),
        "m": jnp.asarray(make_propagator_np(), jnp.float32),
    }


# ------------------------------ forward wrapper --------------------------------
def ndp_forward(consts, inp, y0):
    b = inp.shape[0]
    ng = max(1, -(-b // B_PAD))                 # number of 8-trajectory groups
    bp = ng * B_PAD

    # pad batch to full sublane groups; flatten y0 into the (1, 128) row layout
    xin = inp.reshape(-1, DOF).astype(jnp.float32)       # x.view(-1, input_size)
    x = jnp.zeros((bp, DOF), jnp.float32).at[:b].set(xin)
    x = x.reshape(ng, B_PAD, DOF).astype(jnp.bfloat16)
    y0p = jnp.zeros((bp, DOF), jnp.float32).at[:b].set(
        y0.reshape(-1, DOF).astype(jnp.float32))
    y0g = y0p.reshape(ng, 1, R_PAD)

    def const(arr):  # weights: same block every grid step -> fetched once, resident
        return pl.BlockSpec(arr.shape, lambda i: (0, 0))

    traj = pl.pallas_call(
        _ndp_kernel,
        grid=(ng,),
        in_specs=[
            pl.BlockSpec((1, B_PAD, DOF), lambda i: (i, 0, 0)),   # x per group
            pl.BlockSpec((1, 1, R_PAD), lambda i: (i, 0, 0)),     # y0 per group
            const(consts["w1"]), const(consts["b1"]),
            const(consts["w2"]), const(consts["b2"]),
            const(consts["w3e"]), const(consts["b3e"]),
            const(consts["bmask"]), const(consts["m"]),
        ],
        out_specs=pl.BlockSpec((1, STEPS_PAD, R_PAD), lambda i: (i, 0, 0)),
        out_shape=jax.ShapeDtypeStruct((ng, STEPS_PAD, R_PAD), jnp.float32),
        compiler_params=pltpu.CompilerParams(
            dimension_semantics=("parallel",)),                   # 2 TCs on v7x
    )(x, y0g, consts["w1"], consts["b1"], consts["w2"], consts["b2"],
      consts["w3e"], consts["b3e"], consts["bmask"], consts["m"])

    # (ng, STEPS_PAD, 128) -> (B, STEPS, DOF); trivial XLA slice/reshape/transpose
    y = traj[:, :STEPS, :].reshape(ng, STEPS, B_PAD, DOF)
    y = jnp.transpose(y, (0, 2, 1, 3)).reshape(bp, STEPS, DOF)
    return y[:b]                                # == y.view(B, dof, -1).transpose(2, 1)


# ----------------------------- pure-numpy reference ----------------------------
def reference_forward(params, inp, y0):
    p = {k: np.asarray(v, np.float64) for k, v in params.items()}
    b = inp.shape[0]
    x = np.asarray(inp, np.float64).reshape(-1, DOF)
    h = np.maximum(x @ p["w1"] + p["b1"], 0.0)
    h = np.maximum(h @ p["w2"] + p["b2"], 0.0)
    out = (h @ p["w3"] + p["b3"]) * 1000.0
    goal = out[:, :DOF].reshape(-1)
    w = out[:, DOF:DOF * (N_BASIS + 1)].reshape(-1, N_BASIS)
    y0f = np.asarray(y0, np.float64).reshape(-1)
    dy0 = np.zeros_like(y0f) + 0.01

    c = np.exp(-A_X * np.linspace(0.0, 1.0, N_BASIS))
    hh = np.ones(N_BASIS) * (N_BASIS ** 1.5) / c / A_X
    y = y0f.copy()
    z = dy0 * TAU
    xcan = 1.0
    Y = np.zeros((w.shape[0], STEPS))
    Y[:, 0] = y
    for i in range(STEPS - 1):
        xcan = xcan + (-A_X * xcan * TAU) * DT
        psi = np.exp(-hh * (xcan - c) ** 2)
        fx = (w @ psi) * xcan * (goal - y0f) / psi.sum()
        dz = A_Z * (B_Z * (goal - y) - z) + fx
        dy = z
        dz = dz * TAU
        dy = dy * TAU
        y = y + dy * DT
        z = z + dz * DT
        Y[:, i + 1] = y
    return np.transpose(Y.reshape(b, DOF, STEPS), (0, 2, 1))   # (B, STEPS, DOF)


# ------------------------------------ main --------------------------------------
if __name__ == "__main__":
    key = jax.random.PRNGKey(0)
    kp, kx, ky = jax.random.split(key, 3)
    params = init_params(kp)
    consts = prepare_constants(params)

    fwd = jax.jit(lambda i, y: ndp_forward(consts, i, y))

    # B=2: single grid step; B=10: exercises the 2-step batch grid (padded group)
    for B in (2, 10):
        kxb = jax.random.fold_in(kx, B)
        kyb = jax.random.fold_in(ky, B)
        inp = jax.random.normal(kxb, (B, DOF), jnp.float32)   # ResNet-style feature input
        y0 = jax.random.normal(kyb, (B, DOF), jnp.float32)    # initial state per dof

        out = jax.block_until_ready(fwd(inp, y0))
        assert out.shape == (B, STEPS, DOF)

        ref = reference_forward(params, np.asarray(inp), np.asarray(y0))
        scale = float(np.abs(ref).max()) + 1e-6
        # bf16 MXU operands: ~0.5% relative error; tolerance covers it comfortably.
        np.testing.assert_allclose(np.asarray(out), ref, rtol=5e-2, atol=2e-2 * scale)

    print("KERNEL_OK")
</pallas_src>

<mosaic_0001>
module attributes {stable_mosaic.version = 11 : i64} {
  func.func @_ndp_kernel(%arg0: i32, %arg1: memref<1x8x16xbf16, #tpu.memory_space<vmem>>, %arg2: memref<1x1x128xf32, #tpu.memory_space<vmem>>, %arg3: memref<16x64xbf16, #tpu.memory_space<vmem>>, %arg4: memref<1x64xf32, #tpu.memory_space<vmem>>, %arg5: memref<64x32xbf16, #tpu.memory_space<vmem>>, %arg6: memref<1x32xf32, #tpu.memory_space<vmem>>, %arg7: memref<32x768xbf16, #tpu.memory_space<vmem>>, %arg8: memref<1x768xf32, #tpu.memory_space<vmem>>, %arg9: memref<8x768xf32, #tpu.memory_space<vmem>>, %arg10: memref<104x8xf32, #tpu.memory_space<vmem>>, %arg11: memref<1x104x128xf32, #tpu.memory_space<vmem>>) attributes {dimension_semantics = [#tpu.dimension_semantics<parallel>], iteration_bounds = array<i64: 1>, scalar_prefetch = 0 : i64, scratch_operands = 0 : i64, tpu.core_type = #tpu.core_type<tc>, window_params = [{transform_indices = @transform_0, window_bounds = array<i64: 1, 8, 16>}, {transform_indices = @transform_1, window_bounds = array<i64: 1, 1, 128>}, {pipeline_mode = #tpu.pipeline_mode<synchronous>, transform_indices = @transform_2, window_bounds = array<i64: 16, 64>}, {pipeline_mode = #tpu.pipeline_mode<synchronous>, transform_indices = @transform_3, window_bounds = array<i64: 1, 64>}, {pipeline_mode = #tpu.pipeline_mode<synchronous>, transform_indices = @transform_4, window_bounds = array<i64: 64, 32>}, {pipeline_mode = #tpu.pipeline_mode<synchronous>, transform_indices = @transform_5, window_bounds = array<i64: 1, 32>}, {pipeline_mode = #tpu.pipeline_mode<synchronous>, transform_indices = @transform_6, window_bounds = array<i64: 32, 768>}, {pipeline_mode = #tpu.pipeline_mode<synchronous>, transform_indices = @transform_7, window_bounds = array<i64: 1, 768>}, {pipeline_mode = #tpu.pipeline_mode<synchronous>, transform_indices = @transform_8, window_bounds = array<i64: 8, 768>}, {pipeline_mode = #tpu.pipeline_mode<synchronous>, transform_indices = @transform_9, window_bounds = array<i64: 104, 8>}, {transform_indices = @transform_10, window_bounds = array<i64: 1, 104, 128>}]} {
    %c0 = arith.constant 0 : index
    %c0_0 = arith.constant 0 : index
    %c0_1 = arith.constant 0 : index
    %0 = vector.load %arg1[%c0, %c0_0, %c0_1] : memref<1x8x16xbf16, #tpu.memory_space<vmem>>, vector<1x8x16xbf16>
    %1 = vector.shape_cast %0 : vector<1x8x16xbf16> to vector<8x16xbf16>
    %c0_2 = arith.constant 0 : index
    %c0_3 = arith.constant 0 : index
    %2 = vector.load %arg3[%c0_2, %c0_3] : memref<16x64xbf16, #tpu.memory_space<vmem>>, vector<16x64xbf16>
    %cst = arith.constant dense<0.000000e+00> : vector<8x64xf32>
    %3 = tpu.matmul %1, %2, %cst {dimension_numbers = #tpu.dot_dimension_numbers<[1], [0], [0], [1], [0, 0, 1, 1], [], []>} : vector<8x16xbf16>, vector<16x64xbf16>, vector<8x64xf32> -> vector<8x64xf32>
    %c0_4 = arith.constant 0 : index
    %c0_5 = arith.constant 0 : index
    %4 = vector.load %arg4[%c0_4, %c0_5] : memref<1x64xf32, #tpu.memory_space<vmem>>, vector<1x64xf32>
    %5 = vector.broadcast %4 : vector<1x64xf32> to vector<8x64xf32>
    %6 = arith.addf %3, %5 : vector<8x64xf32>
    %cst_6 = arith.constant 0.000000e+00 : f32
    %7 = vector.broadcast %cst_6 : f32 to vector<8x64xf32>
    %8 = arith.maximumf %6, %7 : vector<8x64xf32>
    %9 = arith.truncf %8 : vector<8x64xf32> to vector<8x64xbf16>
    %c0_7 = arith.constant 0 : index
    %c0_8 = arith.constant 0 : index
    %10 = vector.load %arg5[%c0_7, %c0_8] : memref<64x32xbf16, #tpu.memory_space<vmem>>, vector<64x32xbf16>
    %cst_9 = arith.constant dense<0.000000e+00> : vector<8x32xf32>
    %11 = tpu.matmul %9, %10, %cst_9 {dimension_numbers = #tpu.dot_dimension_numbers<[1], [0], [0], [1], [0, 0, 1, 1], [], []>} : vector<8x64xbf16>, vector<64x32xbf16>, vector<8x32xf32> -> vector<8x32xf32>
    %c0_10 = arith.constant 0 : index
    %c0_11 = arith.constant 0 : index
    %12 = vector.load %arg6[%c0_10, %c0_11] : memref<1x32xf32, #tpu.memory_space<vmem>>, vector<1x32xf32>
    %13 = vector.broadcast %12 : vector<1x32xf32> to vector<8x32xf32>
    %14 = arith.addf %11, %13 : vector<8x32xf32>
    %cst_12 = arith.constant 0.000000e+00 : f32
    %15 = vector.broadcast %cst_12 : f32 to vector<8x32xf32>
    %16 = arith.maximumf %14, %15 : vector<8x32xf32>
    %17 = arith.truncf %16 : vector<8x32xf32> to vector<8x32xbf16>
    %c0_13 = arith.constant 0 : index
    %c0_14 = arith.constant 0 : index
    %18 = vector.load %arg7[%c0_13, %c0_14] : memref<32x768xbf16, #tpu.memory_space<vmem>>, vector<32x768xbf16>
    %cst_15 = arith.constant dense<0.000000e+00> : vector<8x768xf32>
    %19 = tpu.matmul %17, %18, %cst_15 {dimension_numbers = #tpu.dot_dimension_numbers<[1], [0], [0], [1], [0, 0, 1, 1], [], []>} : vector<8x32xbf16>, vector<32x768xbf16>, vector<8x768xf32> -> vector<8x768xf32>
    %c0_16 = arith.constant 0 : index
    %c0_17 = arith.constant 0 : index
    %20 = vector.load %arg8[%c0_16, %c0_17] : memref<1x768xf32, #tpu.memory_space<vmem>>, vector<1x768xf32>
    %21 = vector.broadcast %20 : vector<1x768xf32> to vector<8x768xf32>
    %22 = arith.addf %19, %21 : vector<8x768xf32>
    %c0_18 = arith.constant 0 : index
    %c0_19 = arith.constant 0 : index
    %23 = vector.load %arg9[%c0_18, %c0_19] : memref<8x768xf32, #tpu.memory_space<vmem>>, vector<8x768xf32>
    %24 = arith.mulf %22, %23 : vector<8x768xf32>
    %cst_20 = arith.constant dense<0.000000e+00> : vector<768xf32>
    %25 = vector.multi_reduction <add>, %24, %cst_20 [0] : vector<8x768xf32> to vector<768xf32>
    %26 = vector.shape_cast %25 : vector<768xf32> to vector<1x768xf32>
    %27 = vector.extract_strided_slice %26 {offsets = [0, 0], sizes = [1, 128], strides = [1, 1]} : vector<1x768xf32> to vector<1x128xf32>
    %c0_21 = arith.constant 0 : index
    %c0_22 = arith.constant 0 : index
    %c0_23 = arith.constant 0 : index
    %28 = vector.load %arg2[%c0_21, %c0_22, %c0_23] : memref<1x1x128xf32, #tpu.memory_space<vmem>>, vector<1x1x128xf32>
    %29 = vector.shape_cast %28 : vector<1x1x128xf32> to vector<1x128xf32>
    %30 = arith.subf %27, %29 : vector<1x128xf32>
    %cst_24 = arith.constant 1.000000e+00 : f32
    %31 = vector.broadcast %cst_24 : f32 to vector<1x128xf32>
    %32 = vector.extract_strided_slice %26 {offsets = [0, 128], sizes = [1, 128], strides = [1, 1]} : vector<1x768xf32> to vector<1x128xf32>
    %33 = arith.mulf %32, %30 : vector<1x128xf32>
    %34 = vector.extract_strided_slice %26 {offsets = [0, 256], sizes = [1, 128], strides = [1, 1]} : vector<1x768xf32> to vector<1x128xf32>
    %35 = arith.mulf %34, %30 : vector<1x128xf32>
    %36 = vector.extract_strided_slice %26 {offsets = [0, 384], sizes = [1, 128], strides = [1, 1]} : vector<1x768xf32> to vector<1x128xf32>
    %37 = arith.mulf %36, %30 : vector<1x128xf32>
    %38 = vector.extract_strided_slice %26 {offsets = [0, 512], sizes = [1, 128], strides = [1, 1]} : vector<1x768xf32> to vector<1x128xf32>
    %39 = arith.mulf %38, %30 : vector<1x128xf32>
    %40 = vector.extract_strided_slice %26 {offsets = [0, 640], sizes = [1, 128], strides = [1, 1]} : vector<1x768xf32> to vector<1x128xf32>
    %41 = arith.mulf %40, %30 : vector<1x128xf32>
    %42 = tpu.concatenate %29, %31, %27, %33, %35, %37, %39, %41 in 0 : vector<1x128xf32>, vector<1x128xf32>, vector<1x128xf32>, vector<1x128xf32>, vector<1x128xf32>, vector<1x128xf32>, vector<1x128xf32>, vector<1x128xf32> -> vector<8x128xf32>
    %c0_25 = arith.constant 0 : index
    %c0_26 = arith.constant 0 : index
    %43 = vector.load %arg10[%c0_25, %c0_26] : memref<104x8xf32, #tpu.memory_space<vmem>>, vector<104x8xf32>
    %cst_27 = arith.constant dense<0.000000e+00> : vector<104x128xf32>
    %44 = tpu.matmul %43, %42, %cst_27 {dimension_numbers = #tpu.dot_dimension_numbers<[1], [0], [0], [1], [0, 0, 1, 1], [], []>} : vector<104x8xf32>, vector<8x128xf32>, vector<104x128xf32> -> vector<104x128xf32>
    %c0_28 = arith.constant 0 : index
    %c0_29 = arith.constant 0 : index
    %c0_30 = arith.constant 0 : index
    %45 = vector.load %arg11[%c0_28, %c0_29, %c0_30] : memref<1x104x128xf32, #tpu.memory_space<vmem>>, vector<1x104x128xf32>
    %46 = vector.shape_cast %45 : vector<1x104x128xf32> to vector<104x128xf32>
    %47 = vector.shape_cast %44 : vector<104x128xf32> to vector<1x104x128xf32>
    tpu.vector_store %arg11[%c0_28, %c0_29, %c0_30], %47 {strides = array<i32>} : memref<1x104x128xf32, #tpu.memory_space<vmem>>, vector<1x104x128xf32>,
    return
  }
  func.func @transform_0(%arg0: i32) -> (i32, i32, i32) {
    %c0_i32 = arith.constant 0 : i32
    %c0_i32_0 = arith.constant 0 : i32
    %c0_i32_1 = arith.constant 0 : i32
    return %arg0, %c0_i32, %c0_i32_0 : i32, i32, i32
  }
  func.func @transform_1(%arg0: i32) -> (i32, i32, i32) {
    %c0_i32 = arith.constant 0 : i32
    %c0_i32_0 = arith.constant 0 : i32
    %c0_i32_1 = arith.constant 0 : i32
    return %arg0, %c0_i32, %c0_i32_0 : i32, i32, i32
  }
  func.func @transform_2(%arg0: i32) -> (i32, i32) {
    %c0_i32 = arith.constant 0 : i32
    %c0_i32_0 = arith.constant 0 : i32
    %c0_i32_1 = arith.constant 0 : i32
    return %c0_i32, %c0_i32_0 : i32, i32
  }
  func.func @transform_3(%arg0: i32) -> (i32, i32) {
    %c0_i32 = arith.constant 0 : i32
    %c0_i32_0 = arith.constant 0 : i32
    %c0_i32_1 = arith.constant 0 : i32
    return %c0_i32, %c0_i32_0 : i32, i32
  }
  func.func @transform_4(%arg0: i32) -> (i32, i32) {
    %c0_i32 = arith.constant 0 : i32
    %c0_i32_0 = arith.constant 0 : i32
    %c0_i32_1 = arith.constant 0 : i32
    return %c0_i32, %c0_i32_0 : i32, i32
  }
  func.func @transform_5(%arg0: i32) -> (i32, i32) {
    %c0_i32 = arith.constant 0 : i32
    %c0_i32_0 = arith.constant 0 : i32
    %c0_i32_1 = arith.constant 0 : i32
    return %c0_i32, %c0_i32_0 : i32, i32
  }
  func.func @transform_6(%arg0: i32) -> (i32, i32) {
    %c0_i32 = arith.constant 0 : i32
    %c0_i32_0 = arith.constant 0 : i32
    %c0_i32_1 = arith.constant 0 : i32
    return %c0_i32, %c0_i32_0 : i32, i32
  }
  func.func @transform_7(%arg0: i32) -> (i32, i32) {
    %c0_i32 = arith.constant 0 : i32
    %c0_i32_0 = arith.constant 0 : i32
    %c0_i32_1 = arith.constant 0 : i32
    return %c0_i32, %c0_i32_0 : i32, i32
  }
  func.func @transform_8(%arg0: i32) -> (i32, i32) {
    %c0_i32 = arith.constant 0 : i32
    %c0_i32_0 = arith.constant 0 : i32
    %c0_i32_1 = arith.constant 0 : i32
    return %c0_i32, %c0_i32_0 : i32, i32
  }
  func.func @transform_9(%arg0: i32) -> (i32, i32) {
    %c0_i32 = arith.constant 0 : i32
    %c0_i32_0 = arith.constant 0 : i32
    %c0_i32_1 = arith.constant 0 : i32
    return %c0_i32, %c0_i32_0 : i32, i32
  }
  func.func @transform_10(%arg0: i32) -> (i32, i32, i32) {
    %c0_i32 = arith.constant 0 : i32
    %c0_i32_0 = arith.constant 0 : i32
    %c0_i32_1 = arith.constant 0 : i32
    return %arg0, %c0_i32, %c0_i32_0 : i32, i32, i32
  }
}

</mosaic_0001>

<llo_original>
// kernel: _lambda_.1
$region0: #{_lambda_.1}
  #allocation0 [shape = 'u32[]', space=smem, size = 0x4, offset = 0x4, fixed_abs, tag = 'smem constant byte address 0x4 - core index']
  #allocation1 [shape = 'u32[144,128]{1,0:T(1,128)}', space=vmem, size = 0x12000, scoped, tag = 'internal scratch']
  %s0 = inlined_call_operand.vmem [shape: bf16[1,8,16], index: 0, kind: input, shape index: {}]
  %s1 = inlined_call_operand.vmem [shape: f32[1,1,128], index: 1, kind: input, shape index: {}]
  %s2 = inlined_call_operand.hbm [shape: bf16[16,64], index: 2, kind: input, shape index: {}]
  %s3 = inlined_call_operand.vmem [shape: f32[1,64], index: 3, kind: input, shape index: {}]
  %s4 = inlined_call_operand.hbm [shape: bf16[64,32], index: 4, kind: input, shape index: {}]
  %s5 = inlined_call_operand.vmem [shape: f32[1,32], index: 5, kind: input, shape index: {}]
  %s6 = inlined_call_operand.hbm [shape: bf16[32,768], index: 6, kind: input, shape index: {}]
  %s7 = inlined_call_operand.vmem [shape: f32[1,768], index: 7, kind: input, shape index: {}]
  %s8 = inlined_call_operand.vmem [shape: f32[8,768], index: 8, kind: input, shape index: {}]
  %s9 = inlined_call_operand.hbm [shape: f32[104,8], index: 9, kind: input, shape index: {}]
  %s10 = inlined_call_operand.vmem [shape: f32[1,104,128], index: 10, kind: output, shape index: {}]
  %s11 = sld [smem:[#allocation0]]
  $region66: #{_lambda_.1} parent=0
    _
  %s13 = ssub.s32 1, %s11
  %s14 = scalar_select 0, %s13, %s11
  $region1: #{_lambda_.1} parent=0
    #allocation2 [shape = 'u8[4096]{0}', space=vmem, size = 0x1000, scoped, tag = 'input window, operand 2, single buffered']
    #allocation3 [shape = 's32[1]{0}', space=sflag, size = 0x4, scoped, tag = 'scoped memory for _lambda_.1']
    #allocation4 [shape = 'u8[16384]{0}', space=vmem, size = 0x4000, scoped, tag = 'input window, operand 4, single buffered']
    #allocation5 [shape = 's32[1]{0}', space=sflag, size = 0x4, scoped, tag = 'scoped memory for _lambda_.1']
    #allocation6 [shape = 'u8[49152]{0}', space=vmem, size = 0xc000, scoped, tag = 'input window, operand 6, single buffered']
    #allocation7 [shape = 'u8[53248]{0}', space=vmem, size = 0xd000, scoped, tag = 'input window, operand 9, single buffered']
    #allocation8 [shape = 's32[1]{0}', space=sflag, size = 0x4, scoped, tag = 'scoped memory for _lambda_.1']
    %15 = vsyncpa [#allocation3], 0
    %16 = vsyncpa [#allocation5], 0
    %17 = vsyncpa [#allocation8], 0
    // Predicated region
    $region2: #{_lambda_.1} parent=1 // pred_check
      _
    $region3: #{_lambda_.1} parent=1 // pred_check_branch
      %19 = sbr.rel (0) target = $region5
    $region4: #{_lambda_.1} parent=1 // pred_region
      _
    $region5: #{_lambda_.1} parent=1 // pred_fallthru
      _
    // Predicated region
    $region6: #{_lambda_.1} parent=1 // pred_check
      _
    $region7: #{_lambda_.1} parent=1 // pred_check_branch
      %21 = sbr.rel (0) target = $region9
    $region8: #{_lambda_.1} parent=1 // pred_region
      _
    $region9: #{_lambda_.1} parent=1 // pred_fallthru
      _
    // Predicated region
    $region10: #{_lambda_.1} parent=1 // pred_check
      _
    $region11: #{_lambda_.1} parent=1 // pred_check_branch
      %23 = sbr.rel (0) target = $region13
    $region12: #{_lambda_.1} parent=1 // pred_region
      %s25 = ssub.s32 128, 128
      %26 = vsyncadd [#allocation3], %s25
      %s27 = sshll.u32 [#allocation2], 4
      %s28 = int_to_ptr.vmem [resolvable:$true] %s27
      %33 = dma.hbm_to_vmem [thread:$0]  %s2, 128, %s28, [#allocation3], 64, 64, 4
    $region13: #{_lambda_.1} parent=1 // pred_fallthru
      _
    // Predicated region
    $region14: #{_lambda_.1} parent=1 // pred_check
      _
    $region15: #{_lambda_.1} parent=1 // pred_check_branch
      %35 = sbr.rel (0) target = $region17
    $region16: #{_lambda_.1} parent=1 // pred_region
      _
    $region17: #{_lambda_.1} parent=1 // pred_fallthru
      _
    // Predicated region
    $region18: #{_lambda_.1} parent=1 // pred_check
      _
    $region19: #{_lambda_.1} parent=1 // pred_check_branch
      %37 = sbr.rel (0) target = $region21
    $region20: #{_lambda_.1} parent=1 // pred_region
      %s39 = ssub.s32 512, 512
      %40 = vsyncadd [#allocation5], %s39
      %s41 = sshll.u32 [#allocation4], 4
      %s42 = int_to_ptr.vmem [resolvable:$true] %s41
      %47 = dma.hbm_to_vmem [thread:$0]  %s4, 512, %s42, [#allocation5], 64, 64, 4
    $region21: #{_lambda_.1} parent=1 // pred_fallthru
      _
    // Predicated region
    $region22: #{_lambda_.1} parent=1 // pred_check
      _
    $region23: #{_lambda_.1} parent=1 // pred_check_branch
      %49 = sbr.rel (0) target = $region25
    $region24: #{_lambda_.1} parent=1 // pred_region
      _
    $region25: #{_lambda_.1} parent=1 // pred_fallthru
      _
    // Predicated region
    $region26: #{_lambda_.1} parent=1 // pred_check
      _
    $region27: #{_lambda_.1} parent=1 // pred_check_branch
      %51 = sbr.rel (0) target = $region29
    $region28: #{_lambda_.1} parent=1 // pred_region
      %s53 = ssub.s32 1536, 1536
      %54 = vsyncadd [#allocation5], %s53
      %s55 = sshll.u32 [#allocation6], 4
      %s56 = int_to_ptr.vmem [resolvable:$true] %s55
      %61 = dma.hbm_to_vmem [thread:$0]  %s6, 1536, %s56, [#allocation5], 384, 384, 24
    $region29: #{_lambda_.1} parent=1 // pred_fallthru
      _
    // Predicated region
    $region30: #{_lambda_.1} parent=1 // pred_check
      _
    $region31: #{_lambda_.1} parent=1 // pred_check_branch
      %63 = sbr.rel (0) target = $region33
    $region32: #{_lambda_.1} parent=1 // pred_region
      _
    $region33: #{_lambda_.1} parent=1 // pred_fallthru
      _
    // Predicated region
    $region34: #{_lambda_.1} parent=1 // pred_check
      _
    $region35: #{_lambda_.1} parent=1 // pred_check_branch
      %65 = sbr.rel (0) target = $region37
    $region36: #{_lambda_.1} parent=1 // pred_region
      _
    $region37: #{_lambda_.1} parent=1 // pred_fallthru
      _
    // Predicated region
    $region38: #{_lambda_.1} parent=1 // pred_check
      _
    $region39: #{_lambda_.1} parent=1 // pred_check_branch
      %67 = sbr.rel (0) target = $region41
    $region40: #{_lambda_.1} parent=1 // pred_region
      %s69 = ssub.s32 1664, 1664
      %70 = vsyncadd [#allocation8], %s69
      %s71 = sshll.u32 [#allocation7], 4
      %s72 = int_to_ptr.vmem [resolvable:$true] %s71
      %77 = dma.hbm_to_vmem [thread:$0]  %s9, 1664, %s72, [#allocation8], 128, 128, 8
    $region41: #{_lambda_.1} parent=1 // pred_fallthru
      _
    // Predicated region
    $region42: #{_lambda_.1} parent=1 // pred_check
      _
    $region43: #{_lambda_.1} parent=1 // pred_check_branch
      %79 = sbr.rel (0) target = $region45
    $region44: #{_lambda_.1} parent=1 // pred_region
      %80 = dma.done [#allocation3], 128
    $region45: #{_lambda_.1} parent=1 // pred_fallthru
      _
    // Predicated region
    $region46: #{_lambda_.1} parent=1 // pred_check
      _
    $region47: #{_lambda_.1} parent=1 // pred_check_branch
      %82 = sbr.rel (0) target = $region49
    $region48: #{_lambda_.1} parent=1 // pred_region
      %83 = dma.done [#allocation5], 512
    $region49: #{_lambda_.1} parent=1 // pred_fallthru
      _
    // Predicated region
    $region50: #{_lambda_.1} parent=1 // pred_check
      _
    $region51: #{_lambda_.1} parent=1 // pred_check_branch
      %85 = sbr.rel (0) target = $region53
    $region52: #{_lambda_.1} parent=1 // pred_region
      %86 = dma.done [#allocation5], 1536
    $region53: #{_lambda_.1} parent=1 // pred_fallthru
      _
    // Predicated region
    $region54: #{_lambda_.1} parent=1 // pred_check
      _
    $region55: #{_lambda_.1} parent=1 // pred_check_branch
      %88 = sbr.rel (0) target = $region57
    $region56: #{_lambda_.1} parent=1 // pred_region
      %89 = dma.done [#allocation8], 1664
    $region57: #{_lambda_.1} parent=1 // pred_fallthru
      _
    %v91 = vld [vmem:[%s0] sm:$0xf]
    %v92 = vld [vmem:[#allocation2] sm:$0xf]
    %v93 = vld [vmem:[#allocation2 + $0x4] sm:$0xf]
    %v94 = vld [vmem:[%s3] sm:$0x1]
    %v96 = vlaneseq
    %v97 = vshrl.u32 %v96, 7
    %v98 = vsub.s32 0, %v97
    %v99 = vrot.slane %v94, %v98
    %v103 = vunpack.c.l.b16 %v92
    %v104 = vunpack.c.l.b16 %v93
    %v105 = vpack.c.b16 %v104, %v103
    %vm107 = vcmask 130048
    %v109 = vsel %vm107, %v91, 0
    %111 = vmatprep.subr.bf16.mxu0 0
    %112 = vmatpush1.bf16.msra.mxu0 0
    %113 = vmatprep.subr.bf16.mxu0 0
    %114 = vmatpush1.bf16.msra.mxu0 0
    %115 = vmatprep.subr.bf16.mxu0 0
    %116 = vmatpush1.bf16.msra.mxu0 0
    %117 = vmatprep.subr.bf16.mxu0 0
    %118 = vmatpush1.bf16.msra.mxu0 0
    %119 = vmatprep.subr.bf16.mxu0 0
    %120 = vmatpush1.bf16.msra.mxu0 0
    %121 = vmatprep.subr.bf16.mxu0 0
    %122 = vmatpush1.bf16.msra.mxu0 0
    %123 = vmatprep.subr.bf16.mxu0 0
    %124 = vmatpush1.bf16.msra.mxu0 0
    %125 = vmatprep.subr.bf16.mxu0 0
    %126 = vmatpush1.bf16.msra.mxu0 %v105
    %127 = vmatprep.subr.bf16.mxu0 0
    %128 = vmatpush2.bf16.msra.mxu0 0
    %129 = vmatprep.subr.bf16.mxu0 0
    %130 = vmatpush2.bf16.msra.mxu0 0
    %131 = vmatprep.subr.bf16.mxu0 0
    %132 = vmatpush2.bf16.msra.mxu0 0
    %133 = vmatprep.subr.bf16.mxu0 0
    %134 = vmatpush2.bf16.msra.mxu0 0
    %135 = vmatprep.subr.bf16.mxu0 0
    %136 = vmatpush2.bf16.msra.mxu0 0
    %137 = vmatprep.subr.bf16.mxu0 0
    %138 = vmatpush2.bf16.msra.mxu0 0
    %139 = vmatprep.subr.bf16.mxu0 0
    %140 = vmatpush2.bf16.msra.mxu0 0
    %141 = vmatprep.subr.bf16.mxu0 0
    %142 = vmatpush2.bf16.msra.mxu0 0
    %143 = vmatprep.mubr.bf16.mxu0 0
    %144 = vmatmul.mubr.bf16.gmra.mxu0 %v109
    %v145 = vpop.f32.mrf.mxu0
    %v146 = vadd.f32 %v99, %v145
    %v147 = vpop.f32.mrf.mxu0
    %v148 = vpop.f32.mrf.mxu0
    %v149 = vpop.f32.mrf.mxu0
    %150 = vdwg.mxu0
    %v151 = vmax.f32 %v146, 0.0
    %v152 = vpack.c.bf16 %v151, %v151
    %v153 = vld [vmem:[#allocation4] sm:$0xf]
    %v154 = vld [vmem:[#allocation4 + $0x4] sm:$0xf]
    %v155 = vld [vmem:[#allocation4 + $0x8] sm:$0xf]
    %v156 = vld [vmem:[#allocation4 + $0xc] sm:$0xf]
    %v157 = vld [vmem:[#allocation4 + $0x10] sm:$0xf]
    %v158 = vld [vmem:[#allocation4 + $0x14] sm:$0xf]
    %v159 = vld [vmem:[#allocation4 + $0x18] sm:$0xf]
    %v160 = vld [vmem:[#allocation4 + $0x1c] sm:$0xf]
    %v161 = vld [vmem:[%s5] sm:$0x1]
    %v163 = vlaneseq
    %v164 = vshrl.u32 %v163, 7
    %v165 = vsub.s32 0, %v164
    %v166 = vrot.slane %v161, %v165
    %v176 = vunpack.c.l.b16 %v153
    %v177 = vunpack.c.l.b16 %v154
    %v178 = vunpack.c.l.b16 %v155
    %v179 = vunpack.c.l.b16 %v156
    %v180 = vunpack.c.l.b16 %v157
    %v181 = vunpack.c.l.b16 %v158
    %v182 = vunpack.c.l.b16 %v159
    %v183 = vunpack.c.l.b16 %v160
    %v184 = vpack.c.b16 %v177, %v176
    %v185 = vpack.c.b16 %v179, %v178
    %v186 = vpack.c.b16 %v181, %v180
    %v187 = vpack.c.b16 %v183, %v182
    %vm192 = vcmask 523264
    %v194 = vsel %vm192, %v152, 0
    %196 = vmatprep.subr.bf16.mxu0 0
    %197 = vmatpush1.bf16.msra.mxu0 0
    %198 = vmatprep.subr.bf16.mxu0 0
    %199 = vmatpush1.bf16.msra.mxu0 0
    %200 = vmatprep.subr.bf16.mxu0 0
    %201 = vmatpush1.bf16.msra.mxu0 0
    %202 = vmatprep.subr.bf16.mxu0 0
    %203 = vmatpush1.bf16.msra.mxu0 0
    %204 = vmatprep.subr.bf16.mxu0 0
    %205 = vmatpush1.bf16.msra.mxu0 %v187
    %206 = vmatprep.subr.bf16.mxu0 0
    %207 = vmatpush1.bf16.msra.mxu0 %v186
    %208 = vmatprep.subr.bf16.mxu0 0
    %209 = vmatpush1.bf16.msra.mxu0 %v185
    %210 = vmatprep.subr.bf16.mxu0 0
    %211 = vmatpush1.bf16.msra.mxu0 %v184
    %212 = vmatprep.subr.bf16.mxu0 0
    %213 = vmatpush2.bf16.msra.mxu0 0
    %214 = vmatprep.subr.bf16.mxu0 0
    %215 = vmatpush2.bf16.msra.mxu0 0
    %216 = vmatprep.subr.bf16.mxu0 0
    %217 = vmatpush2.bf16.msra.mxu0 0
    %218 = vmatprep.subr.bf16.mxu0 0
    %219 = vmatpush2.bf16.msra.mxu0 0
    %220 = vmatprep.subr.bf16.mxu0 0
    %221 = vmatpush2.bf16.msra.mxu0 0
    %222 = vmatprep.subr.bf16.mxu0 0
    %223 = vmatpush2.bf16.msra.mxu0 0
    %224 = vmatprep.subr.bf16.mxu0 0
    %225 = vmatpush2.bf16.msra.mxu0 0
    %226 = vmatprep.subr.bf16.mxu0 0
    %227 = vmatpush2.bf16.msra.mxu0 0
    %228 = vmatprep.mubr.bf16.mxu0 0
    %229 = vmatmul.mubr.bf16.gmra.mxu0 %v194
    %v230 = vpop.f32.mrf.mxu0
    %v231 = vadd.f32 %v166, %v230
    %v232 = vpop.f32.mrf.mxu0
    %v233 = vpop.f32.mrf.mxu0
    %v234 = vpop.f32.mrf.mxu0
    %235 = vdwg.mxu0
    %v236 = vmax.f32 %v231, 0.0
    %v237 = vpack.c.bf16 %v236, %v236
    %v238 = vld [vmem:[#allocation6] sm:$0xff]
    %v239 = vld [vmem:[#allocation6 + $0x8] sm:$0xff]
    %v240 = vld [vmem:[#allocation6 + $0x10] sm:$0xff]
    %v241 = vld [vmem:[#allocation6 + $0x18] sm:$0xff]
    %v242 = vld [vmem:[#allocation6 + $0x20] sm:$0xff]
    %v243 = vld [vmem:[#allocation6 + $0x28] sm:$0xff]
    %v244 = vld [vmem:[#allocation6 + $0x30] sm:$0xff]
    %v245 = vld [vmem:[#allocation6 + $0x38] sm:$0xff]
    %v246 = vld [vmem:[#allocation6 + $0x40] sm:$0xff]
    %v247 = vld [vmem:[#allocation6 + $0x48] sm:$0xff]
    %v248 = vld [vmem:[#allocation6 + $0x50] sm:$0xff]
    %v249 = vld [vmem:[#allocation6 + $0x58] sm:$0xff]
    %v250 = vld [vmem:[%s7] sm:$0x3f]
    %v252 = vlaneseq
    %v253 = vshrl.u32 %v252, 7
    %v254 = vsub.s32 0, %v253
    %v255 = vrot.slane %v250, %v254
    %v256 = vlaneseq
    %v257 = vshrl.u32 %v256, 7
    %v258 = vsub.s32 1, %v257
    %v259 = vrot.slane %v250, %v258
    %v260 = vlaneseq
    %v261 = vshrl.u32 %v260, 7
    %v262 = vsub.s32 2, %v261
    %v263 = vrot.slane %v250, %v262
    %v264 = vlaneseq
    %v265 = vshrl.u32 %v264, 7
    %v266 = vsub.s32 3, %v265
    %v267 = vrot.slane %v250, %v266
    %v268 = vlaneseq
    %v269 = vshrl.u32 %v268, 7
    %v270 = vsub.s32 4, %v269
    %v271 = vrot.slane %v250, %v270
    %v272 = vlaneseq
    %v273 = vshrl.u32 %v272, 7
    %v274 = vsub.s32 5, %v273
    %v275 = vrot.slane %v250, %v274
    %v294 = vunpack.c.l.b16 %v238
    %v295 = vunpack.c.h.b16 %v238
    %v296 = vunpack.c.l.b16 %v239
    %v297 = vunpack.c.h.b16 %v239
    %v298 = vunpack.c.l.b16 %v240
    %v299 = vunpack.c.h.b16 %v240
    %v300 = vunpack.c.l.b16 %v241
    %v301 = vunpack.c.h.b16 %v241
    %v302 = vunpack.c.l.b16 %v242
    %v303 = vunpack.c.h.b16 %v242
    %v304 = vunpack.c.l.b16 %v243
    %v305 = vunpack.c.h.b16 %v243
    %v306 = vunpack.c.l.b16 %v244
    %v307 = vunpack.c.h.b16 %v244
    %v308 = vunpack.c.l.b16 %v245
    %v309 = vunpack.c.h.b16 %v245
    %v310 = vunpack.c.l.b16 %v246
    %v311 = vunpack.c.h.b16 %v246
    %v312 = vunpack.c.l.b16 %v247
    %v313 = vunpack.c.h.b16 %v247
    %v314 = vunpack.c.l.b16 %v248
    %v315 = vunpack.c.h.b16 %v248
    %v316 = vunpack.c.l.b16 %v249
    %v317 = vunpack.c.h.b16 %v249
    %v318 = vpack.c.b16 %v300, %v294
    %v319 = vpack.c.b16 %v301, %v295
    %v320 = vpack.c.b16 %v302, %v296
    %v321 = vpack.c.b16 %v303, %v297
    %v322 = vpack.c.b16 %v304, %v298
    %v323 = vpack.c.b16 %v305, %v299
    %v324 = vpack.c.b16 %v312, %v306
    %v325 = vpack.c.b16 %v313, %v307
    %v326 = vpack.c.b16 %v314, %v308
    %v327 = vpack.c.b16 %v315, %v309
    %v328 = vpack.c.b16 %v316, %v310
    %v329 = vpack.c.b16 %v317, %v311
    %vm342 = vcmask 261120
    %v344 = vsel %vm342, %v237, 0
    %346 = vmatprep.subr.bf16.mxu0 0
    %347 = vmatpush1.bf16.msra.mxu0 0
    %348 = vmatprep.subr.bf16.mxu0 0
    %349 = vmatpush1.bf16.msra.mxu0 0
    %350 = vmatprep.subr.bf16.mxu0 0
    %351 = vmatpush1.bf16.msra.mxu0 0
    %352 = vmatprep.subr.bf16.mxu0 0
    %353 = vmatpush1.bf16.msra.mxu0 0
    %354 = vmatprep.subr.bf16.mxu0 0
    %355 = vmatpush1.bf16.msra.mxu0 0
    %356 = vmatprep.subr.bf16.mxu0 0
    %357 = vmatpush1.bf16.msra.mxu0 0
    %358 = vmatprep.subr.bf16.mxu0 %v325
    %359 = vmatpush1.bf16.msra.mxu0 %v324
    %360 = vmatprep.subr.bf16.mxu0 %v319
    %361 = vmatpush1.bf16.msra.mxu0 %v318
    %362 = vmatprep.subr.bf16.mxu0 0
    %363 = vmatpush2.bf16.msra.mxu0 0
    %364 = vmatprep.subr.bf16.mxu0 0
    %365 = vmatpush2.bf16.msra.mxu0 0
    %366 = vmatprep.subr.bf16.mxu0 0
    %367 = vmatpush2.bf16.msra.mxu0 0
    %368 = vmatprep.subr.bf16.mxu0 0
    %369 = vmatpush2.bf16.msra.mxu0 0
    %370 = vmatprep.subr.bf16.mxu0 0
    %371 = vmatpush2.bf16.msra.mxu0 0
    %372 = vmatprep.subr.bf16.mxu0 0
    %373 = vmatpush2.bf16.msra.mxu0 0
    %374 = vmatprep.subr.bf16.mxu0 0
    %375 = vmatpush2.bf16.msra.mxu0 0
    %376 = vmatprep.subr.bf16.mxu0 0
    %377 = vmatpush2.bf16.msra.mxu0 0
    %378 = vmatprep.mubr.bf16.mxu0 0
    %379 = vmatmul.mubr.bf16.gmra.mxu0 %v344
    %v380 = vpop.f32.mrf.mxu0
    %v381 = vadd.f32 %v255, %v380
    %v382 = vpop.f32.mrf.mxu0
    %v383 = vadd.f32 %v259, %v382
    %v384 = vpop.f32.mrf.mxu0
    %v385 = vpop.f32.mrf.mxu0
    %386 = vdwg.mxu0
    %387 = vmatprep.subr.bf16.mxu0 0
    %388 = vmatpush1.bf16.msra.mxu0 0
    %389 = vmatprep.subr.bf16.mxu0 0
    %390 = vmatpush1.bf16.msra.mxu0 0
    %391 = vmatprep.subr.bf16.mxu0 0
    %392 = vmatpush1.bf16.msra.mxu0 0
    %393 = vmatprep.subr.bf16.mxu0 0
    %394 = vmatpush1.bf16.msra.mxu0 0
    %395 = vmatprep.subr.bf16.mxu0 0
    %396 = vmatpush1.bf16.msra.mxu0 0
    %397 = vmatprep.subr.bf16.mxu0 0
    %398 = vmatpush1.bf16.msra.mxu0 0
    %399 = vmatprep.subr.bf16.mxu0 %v327
    %400 = vmatpush1.bf16.msra.mxu0 %v326
    %401 = vmatprep.subr.bf16.mxu0 %v321
    %402 = vmatpush1.bf16.msra.mxu0 %v320
    %403 = vmatprep.subr.bf16.mxu0 0
    %404 = vmatpush2.bf16.msra.mxu0 0
    %405 = vmatprep.subr.bf16.mxu0 0
    %406 = vmatpush2.bf16.msra.mxu0 0
    %407 = vmatprep.subr.bf16.mxu0 0
    %408 = vmatpush2.bf16.msra.mxu0 0
    %409 = vmatprep.subr.bf16.mxu0 0
    %410 = vmatpush2.bf16.msra.mxu0 0
    %411 = vmatprep.subr.bf16.mxu0 0
    %412 = vmatpush2.bf16.msra.mxu0 0
    %413 = vmatprep.subr.bf16.mxu0 0
    %414 = vmatpush2.bf16.msra.mxu0 0
    %415 = vmatprep.subr.bf16.mxu0 0
    %416 = vmatpush2.bf16.msra.mxu0 0
    %417 = vmatprep.subr.bf16.mxu0 0
    %418 = vmatpush2.bf16.msra.mxu0 0
    %419 = vmatprep.mubr.bf16.mxu0 0
    %420 = vmatmul.mubr.bf16.gmra.mxu0 %v344
    %v421 = vpop.f32.mrf.mxu0
    %v422 = vadd.f32 %v263, %v421
    %v423 = vpop.f32.mrf.mxu0
    %v424 = vadd.f32 %v267, %v423
    %v425 = vpop.f32.mrf.mxu0
    %v426 = vpop.f32.mrf.mxu0
    %427 = vdwg.mxu0
    %428 = vmatprep.subr.bf16.mxu0 0
    %429 = vmatpush1.bf16.msra.mxu0 0
    %430 = vmatprep.subr.bf16.mxu0 0
    %431 = vmatpush1.bf16.msra.mxu0 0
    %432 = vmatprep.subr.bf16.mxu0 0
    %433 = vmatpush1.bf16.msra.mxu0 0
    %434 = vmatprep.subr.bf16.mxu0 0
    %435 = vmatpush1.bf16.msra.mxu0 0
    %436 = vmatprep.subr.bf16.mxu0 0
    %437 = vmatpush1.bf16.msra.mxu0 0
    %438 = vmatprep.subr.bf16.mxu0 0
    %439 = vmatpush1.bf16.msra.mxu0 0
    %440 = vmatprep.subr.bf16.mxu0 %v329
    %441 = vmatpush1.bf16.msra.mxu0 %v328
    %442 = vmatprep.subr.bf16.mxu0 %v323
    %443 = vmatpush1.bf16.msra.mxu0 %v322
    %444 = vmatprep.subr.bf16.mxu0 0
    %445 = vmatpush2.bf16.msra.mxu0 0
    %446 = vmatprep.subr.bf16.mxu0 0
    %447 = vmatpush2.bf16.msra.mxu0 0
    %448 = vmatprep.subr.bf16.mxu0 0
    %449 = vmatpush2.bf16.msra.mxu0 0
    %450 = vmatprep.subr.bf16.mxu0 0
    %451 = vmatpush2.bf16.msra.mxu0 0
    %452 = vmatprep.subr.bf16.mxu0 0
    %453 = vmatpush2.bf16.msra.mxu0 0
    %454 = vmatprep.subr.bf16.mxu0 0
    %455 = vmatpush2.bf16.msra.mxu0 0
    %456 = vmatprep.subr.bf16.mxu0 0
    %457 = vmatpush2.bf16.msra.mxu0 0
    %458 = vmatprep.subr.bf16.mxu0 0
    %459 = vmatpush2.bf16.msra.mxu0 0
    %460 = vmatprep.mubr.bf16.mxu0 0
    %461 = vmatmul.mubr.bf16.gmra.mxu0 %v344
    %v462 = vpop.f32.mrf.mxu0
    %v463 = vadd.f32 %v271, %v462
    %v464 = vpop.f32.mrf.mxu0
    %v465 = vadd.f32 %v275, %v464
    %v466 = vpop.f32.mrf.mxu0
    %v467 = vpop.f32.mrf.mxu0
    %468 = vdwg.mxu0
    %v469 = vld [vmem:[%s8] sm:$0xff]
    %v470 = vld [vmem:[%s8 + $0x8] sm:$0xff]
    %v471 = vld [vmem:[%s8 + $0x10] sm:$0xff]
    %v472 = vld [vmem:[%s8 + $0x18] sm:$0xff]
    %v473 = vld [vmem:[%s8 + $0x20] sm:$0xff]
    %v474 = vld [vmem:[%s8 + $0x28] sm:$0xff]
    %v475 = vmul.f32 %v381, %v469
    %v476 = vmul.f32 %v383, %v470
    %v477 = vmul.f32 %v422, %v471
    %v478 = vmul.f32 %v424, %v472
    %v479 = vmul.f32 %v463, %v473
    %v480 = vmul.f32 %v465, %v474
    %v481 = vrot.slane %v475, 4
    %v482 = vadd.f32 %v475, %v481
    %v483 = vrot.slane %v482, 2
    %v484 = vadd.f32 %v482, %v483
    %v485 = vrot.slane %v484, 1
    %v486 = vadd.f32 %v484, %v485
    %v487 = vrot.slane %v476, 4
    %v488 = vadd.f32 %v476, %v487
    %v489 = vrot.slane %v488, 2
    %v490 = vadd.f32 %v488, %v489
    %v491 = vrot.slane %v490, 1
    %v492 = vadd.f32 %v490, %v491
    %v493 = vrot.slane %v477, 4
    %v494 = vadd.f32 %v477, %v493
    %v495 = vrot.slane %v494, 2
    %v496 = vadd.f32 %v494, %v495
    %v497 = vrot.slane %v496, 1
    %v498 = vadd.f32 %v496, %v497
    %v499 = vrot.slane %v478, 4
    %v500 = vadd.f32 %v478, %v499
    %v501 = vrot.slane %v500, 2
    %v502 = vadd.f32 %v500, %v501
    %v503 = vrot.slane %v502, 1
    %v504 = vadd.f32 %v502, %v503
    %v505 = vrot.slane %v479, 4
    %v506 = vadd.f32 %v479, %v505
    %v507 = vrot.slane %v506, 2
    %v508 = vadd.f32 %v506, %v507
    %v509 = vrot.slane %v508, 1
    %v510 = vadd.f32 %v508, %v509
    %v511 = vrot.slane %v480, 4
    %v512 = vadd.f32 %v480, %v511
    %v513 = vrot.slane %v512, 2
    %v514 = vadd.f32 %v512, %v513
    %v515 = vrot.slane %v514, 1
    %v516 = vadd.f32 %v514, %v515
    %v517 = vld [vmem:[%s1] sm:$0x1]
    %v518 = vsub.f32 %v486, %v517
    %v519 = vmul.f32 %v492, %v518
    %v520 = vmul.f32 %v498, %v518
    %v521 = vmul.f32 %v504, %v518
    %v522 = vmul.f32 %v510, %v518
    %v523 = vmul.f32 %v516, %v518
    %v525 = vrot.slane %v519, 5
    %v528 = vrot.slane %v520, 4
    %v531 = vrot.slane %v521, 3
    %v534 = vrot.slane %v522, 2
    %v537 = vrot.slane %v523, 1
    %vm539 = vcmask 1040384
    %v540 = vsel %vm539, %v517, 1.0
    %vm541 = vcmask 1041408
    %v542 = vsel %vm541, %v540, %v486
    %vm543 = vcmask 1042432
    %v544 = vsel %vm543, %v542, %v525
    %vm545 = vcmask 1043456
    %v546 = vsel %vm545, %v544, %v528
    %vm547 = vcmask 1044480
    %v548 = vsel %vm547, %v546, %v531
    %vm549 = vcmask 1045504
    %v550 = vsel %vm549, %v548, %v534
    %vm551 = vcmask 1046528
    %v552 = vsel %vm551, %v550, %v537
    %v553 = vld [vmem:[#allocation7] sm:$0xff]
    %v554 = vld [vmem:[#allocation7 + $0x8] sm:$0xff]
    %v555 = vld [vmem:[#allocation7 + $0x10] sm:$0xff]
    %v556 = vld [vmem:[#allocation7 + $0x18] sm:$0xff]
    %v557 = vld [vmem:[#allocation7 + $0x20] sm:$0xff]
    %v558 = vld [vmem:[#allocation7 + $0x28] sm:$0xff]
    %v559 = vld [vmem:[#allocation7 + $0x30] sm:$0xff]
    %v560 = vld [vmem:[#allocation7 + $0x38] sm:$0xff]
    %v561 = vld [vmem:[#allocation7 + $0x40] sm:$0xff]
    %v562 = vld [vmem:[#allocation7 + $0x48] sm:$0xff]
    %v563 = vld [vmem:[#allocation7 + $0x50] sm:$0xff]
    %v564 = vld [vmem:[#allocation7 + $0x58] sm:$0xff]
    %v565 = vld [vmem:[#allocation7 + $0x60] sm:$0xff]
    %vm566 = vcmask 64512
    %v568 = vsel %vm566, %v553, 0
    %v571 = vsel %vm566, %v554, 0
    %v574 = vsel %vm566, %v555, 0
    %v577 = vsel %vm566, %v556, 0
    %v580 = vsel %vm566, %v557, 0
    %v583 = vsel %vm566, %v558, 0
    %v586 = vsel %vm566, %v559, 0
    %v589 = vsel %vm566, %v560, 0
    %v592 = vsel %vm566, %v561, 0
    %v595 = vsel %vm566, %v562, 0
    %v598 = vsel %vm566, %v563, 0
    %v601 = vsel %vm566, %v564, 0
    %v604 = vsel %vm566, %v565, 0
    %606 = vmatprep.subr.mxu0 0.0
    %607 = vmatpush1.msra.mxu0 0.0
    %608 = vmatprep.subr.mxu0 0.0
    %609 = vmatpush1.msra.mxu0 0.0
    %610 = vmatprep.subr.mxu0 0.0
    %611 = vmatpush1.msra.mxu0 0.0
    %612 = vmatprep.subr.mxu0 0.0
    %613 = vmatpush1.msra.mxu0 0.0
    %614 = vmatprep.subr.mxu0 0.0
    %615 = vmatpush1.msra.mxu0 0.0
    %616 = vmatprep.subr.mxu0 0.0
    %617 = vmatpush1.msra.mxu0 0.0
    %618 = vmatprep.subr.mxu0 0.0
    %619 = vmatpush1.msra.mxu0 0.0
    %620 = vmatprep.subr.mxu0 0.0
    %621 = vmatpush1.msra.mxu0 0.0
    %622 = vmatprep.subr.mxu0 0.0
    %623 = vmatpush1.msra.mxu0 0.0
    %624 = vmatprep.subr.mxu0 0.0
    %625 = vmatpush1.msra.mxu0 0.0
    %626 = vmatprep.subr.mxu0 0.0
    %627 = vmatpush1.msra.mxu0 0.0
    %628 = vmatprep.subr.mxu0 0.0
    %629 = vmatpush1.msra.mxu0 0.0
    %630 = vmatprep.subr.mxu0 0.0
    %631 = vmatpush1.msra.mxu0 0.0
    %632 = vmatprep.subr.mxu0 0.0
    %633 = vmatpush1.msra.mxu0 0.0
    %634 = vmatprep.subr.mxu0 0.0
    %635 = vmatpush1.msra.mxu0 0.0
    %636 = vmatprep.subr.mxu0 0.0
    %637 = vmatpush1.msra.mxu0 %v552
    %638 = vmatprep.subr.mxu0 0.0
    %639 = vmatpush2.msra.mxu0 0.0
    %640 = vmatprep.subr.mxu0 0.0
    %641 = vmatpush2.msra.mxu0 0.0
    %642 = vmatprep.subr.mxu0 0.0
    %643 = vmatpush2.msra.mxu0 0.0
    %644 = vmatprep.subr.mxu0 0.0
    %645 = vmatpush2.msra.mxu0 0.0
    %646 = vmatprep.subr.mxu0 0.0
    %647 = vmatpush2.msra.mxu0 0.0
    %648 = vmatprep.subr.mxu0 0.0
    %649 = vmatpush2.msra.mxu0 0.0
    %650 = vmatprep.subr.mxu0 0.0
    %651 = vmatpush2.msra.mxu0 0.0
    %652 = vmatprep.subr.mxu0 0.0
    %653 = vmatpush2.msra.mxu0 0.0
    %654 = vmatprep.subr.mxu0 0.0
    %655 = vmatpush2.msra.mxu0 0.0
    %656 = vmatprep.subr.mxu0 0.0
    %657 = vmatpush2.msra.mxu0 0.0
    %658 = vmatprep.subr.mxu0 0.0
    %659 = vmatpush2.msra.mxu0 0.0
    %660 = vmatprep.subr.mxu0 0.0
    %661 = vmatpush2.msra.mxu0 0.0
    %662 = vmatprep.subr.mxu0 0.0
    %663 = vmatpush2.msra.mxu0 0.0
    %664 = vmatprep.subr.mxu0 0.0
    %665 = vmatpush2.msra.mxu0 0.0
    %666 = vmatprep.subr.mxu0 0.0
    %667 = vmatpush2.msra.mxu0 0.0
    %668 = vmatprep.subr.mxu0 0.0
    %669 = vmatpush2.msra.mxu0 0.0
    %670 = vmatprep.mubr.f32.mxu0 0.0
    %671 = vmatmul.mubr.f32.gmra.mxu0 %v568
    %v672 = vpop.f32.mrf.mxu0
    %v673 = vadd.f32 0.0, %v672
    %v674 = vpop.f32.mrf.mxu0
    %675 = vmatprep.mubr.f32.mxu0 0.0
    %676 = vmatmul.mubr.f32.gmra.mxu0 %v571
    %v677 = vpop.f32.mrf.mxu0
    %v678 = vadd.f32 0.0, %v677
    %v679 = vpop.f32.mrf.mxu0
    %680 = vmatprep.mubr.f32.mxu0 0.0
    %681 = vmatmul.mubr.f32.gmra.mxu0 %v574
    %v682 = vpop.f32.mrf.mxu0
    %v683 = vadd.f32 0.0, %v682
    %v684 = vpop.f32.mrf.mxu0
    %685 = vmatprep.mubr.f32.mxu0 0.0
    %686 = vmatmul.mubr.f32.gmra.mxu0 %v577
    %v687 = vpop.f32.mrf.mxu0
    %v688 = vadd.f32 0.0, %v687
    %v689 = vpop.f32.mrf.mxu0
    %690 = vmatprep.mubr.f32.mxu0 0.0
    %691 = vmatmul.mubr.f32.gmra.mxu0 %v580
    %v692 = vpop.f32.mrf.mxu0
    %v693 = vadd.f32 0.0, %v692
    %v694 = vpop.f32.mrf.mxu0
    %695 = vmatprep.mubr.f32.mxu0 0.0
    %696 = vmatmul.mubr.f32.gmra.mxu0 %v583
    %v697 = vpop.f32.mrf.mxu0
    %v698 = vadd.f32 0.0, %v697
    %v699 = vpop.f32.mrf.mxu0
    %700 = vmatprep.mubr.f32.mxu0 0.0
    %701 = vmatmul.mubr.f32.gmra.mxu0 %v586
    %v702 = vpop.f32.mrf.mxu0
    %v703 = vadd.f32 0.0, %v702
    %v704 = vpop.f32.mrf.mxu0
    %705 = vmatprep.mubr.f32.mxu0 0.0
    %706 = vmatmul.mubr.f32.gmra.mxu0 %v589
    %v707 = vpop.f32.mrf.mxu0
    %v708 = vadd.f32 0.0, %v707
    %v709 = vpop.f32.mrf.mxu0
    %710 = vmatprep.mubr.f32.mxu0 0.0
    %711 = vmatmul.mubr.f32.gmra.mxu0 %v592
    %v712 = vpop.f32.mrf.mxu0
    %v713 = vadd.f32 0.0, %v712
    %v714 = vpop.f32.mrf.mxu0
    %715 = vmatprep.mubr.f32.mxu0 0.0
    %716 = vmatmul.mubr.f32.gmra.mxu0 %v595
    %v717 = vpop.f32.mrf.mxu0
    %v718 = vadd.f32 0.0, %v717
    %v719 = vpop.f32.mrf.mxu0
    %720 = vmatprep.mubr.f32.mxu0 0.0
    %721 = vmatmul.mubr.f32.gmra.mxu0 %v598
    %v722 = vpop.f32.mrf.mxu0
    %v723 = vadd.f32 0.0, %v722
    %v724 = vpop.f32.mrf.mxu0
    %725 = vmatprep.mubr.f32.mxu0 0.0
    %726 = vmatmul.mubr.f32.gmra.mxu0 %v601
    %v727 = vpop.f32.mrf.mxu0
    %v728 = vadd.f32 0.0, %v727
    %v729 = vpop.f32.mrf.mxu0
    %730 = vmatprep.mubr.f32.mxu0 0.0
    %731 = vmatmul.mubr.f32.gmra.mxu0 %v604
    %v732 = vpop.f32.mrf.mxu0
    %v733 = vadd.f32 0.0, %v732
    %v734 = vpop.f32.mrf.mxu0
    %735 = vdwg.mxu0
    %736 = vst [vmem:[%s10] sm:$0xff] %v673
    %737 = vst [vmem:[%s10 + $0x8] sm:$0xff] %v678
    %738 = vst [vmem:[%s10 + $0x10] sm:$0xff] %v683
    %739 = vst [vmem:[%s10 + $0x18] sm:$0xff] %v688
    %740 = vst [vmem:[%s10 + $0x20] sm:$0xff] %v693
    %741 = vst [vmem:[%s10 + $0x28] sm:$0xff] %v698
    %742 = vst [vmem:[%s10 + $0x30] sm:$0xff] %v703
    %743 = vst [vmem:[%s10 + $0x38] sm:$0xff] %v708
    %744 = vst [vmem:[%s10 + $0x40] sm:$0xff] %v713
    %745 = vst [vmem:[%s10 + $0x48] sm:$0xff] %v718
    %746 = vst [vmem:[%s10 + $0x50] sm:$0xff] %v723
    %747 = vst [vmem:[%s10 + $0x58] sm:$0xff] %v728
    %748 = vst [vmem:[%s10 + $0x60] sm:$0xff] %v733
    // Predicated region
    $region58: #{_lambda_.1} parent=1 // pred_check
      _
    $region59: #{_lambda_.1} parent=1 // pred_check_branch
      %750 = sbr.rel (0) target = $region61
    $region60: #{_lambda_.1} parent=1 // pred_region
      _
    $region61: #{_lambda_.1} parent=1 // pred_fallthru
      _
    // Predicated region
    $region62: #{_lambda_.1} parent=1 // pred_check
      _
    $region63: #{_lambda_.1} parent=1 // pred_check_branch
      %752 = sbr.rel (0) target = $region65
    $region64: #{_lambda_.1} parent=1 // pred_region
      _
    $region65: #{_lambda_.1} parent=1 // pred_fallthru
      _
    %753 = vsyncpa [#allocation3], 1
    %754 = vsyncpa [#allocation5], 1
    %755 = vsyncpa [#allocation8], 1

</llo_original>
